<compile_context>
chip_gen: v5e
topology: v5e:2x2
jax: 0.10.0
libtpu: 0.0.40
codegen_flags: <defaults>
</compile_context>

<pallas_src>
import functools

import jax
import jax.numpy as jnp
from jax import lax
from jax.experimental import pallas as pl
from jax.experimental.pallas import tpu as pltpu


def _round_up(x, m):
    return ((x + m - 1) // m) * m


def _ncc_kernel(x_ref, p_ref, m_ref, p2t_ref, dist_ref, idx_ref, out_ref, *,
                D, P_real):
    f32 = jnp.float32
    x = x_ref[...]          # (bB, TDp)  compute dtype (f32 or bf16)
    p = p_ref[...]          # (Pp, TDp)  compute dtype
    m = m_ref[...]          # (bB, Tp)   f32, compact mask
    p2t = p2t_ref[...]      # (Pp, Tp)   f32, sum_d proto^2

    bB, TDp = x.shape
    Pp = p.shape[0]
    Tp = m.shape[1]

    # ---- expand mask over the feature dim in-kernel (tiny 0/1 MXU matmul) ----
    # E[t, k] = 1 iff k in [t*D, (t+1)*D); padded rows/lanes stay exactly 0.
    t_io = lax.broadcasted_iota(jnp.int32, (Tp, TDp), 0)
    k_io = lax.broadcasted_iota(jnp.int32, (Tp, TDp), 1)
    expand = jnp.logical_and(k_io >= t_io * D, k_io < (t_io + 1) * D).astype(f32)
    m_td = jnp.dot(m, expand, preferred_element_type=f32)            # (bB, TDp)

    x_f32 = x.astype(f32)
    xm = x_f32 * m_td                                                # masked x (f32)

    # ---- distances via ||x-p||^2 expansion: heavy terms on the MXU ----
    xterm = jnp.sum(xm * x_f32, axis=1, keepdims=True)               # (bB, 1)
    pterm = lax.dot_general(m, p2t, (((1,), (1,)), ((), ())),
                            preferred_element_type=f32)              # (bB, Pp)
    cross = lax.dot_general(xm.astype(p.dtype), p, (((1,), (1,)), ((), ())),
                            preferred_element_type=f32)              # (bB, Pp)
    dist = jnp.maximum(xterm + pterm - 2.0 * cross, 0.0)             # (bB, Pp)
    dist_ref[...] = dist

    # ---- first-min argmin over the real prototype columns ----
    col = lax.broadcasted_iota(jnp.int32, (bB, Pp), 1)
    dist_v = jnp.where(col < P_real, dist, jnp.inf)                  # mask padding
    min_d = jnp.min(dist_v, axis=1, keepdims=True)
    idx_f = jnp.min(jnp.where(dist_v == min_d, col.astype(f32), float(Pp)),
                    axis=1, keepdims=True)
    idx = jnp.minimum(idx_f, float(P_real - 1)).astype(jnp.int32)    # NaN guard
    idx_ref[...] = idx

    # ---- gather winning prototype as one small MXU matmul: onehot @ p ----
    # TODO(synk): replace with a scalar-indexed row copy once a P-blocked grid exists.
    onehot = (col == idx).astype(p.dtype)                            # (bB, Pp)
    out = lax.dot_general(onehot, p, (((1,), (0,)), ((), ())),
                          preferred_element_type=f32)                # (bB, TDp)
    out_ref[...] = out.astype(out_ref.dtype)


def ncc_forward(input_seq, label, mask, prototypes, *, compute_dtype=None,
                block_b=None):
    """Pallas-backed Ncc.forward (missing_dates=False, return_all=False)."""
    B, T, D = input_seq.shape
    P = prototypes.shape[0]
    TD = T * D
    cdt = jnp.dtype(compute_dtype) if compute_dtype is not None \
        else jnp.dtype(input_seq.dtype)
    proto_dt = jnp.dtype(prototypes.dtype)

    # ---- lane / sublane padding (zero padding is exact for every term) ----
    TDp = _round_up(TD, 128)
    Tp = _round_up(T, 128)
    Pp = _round_up(P, 128)
    Bp = _round_up(max(B, 8), 8)
    if block_b is None:
        block_b = Bp if Bp <= 128 else 128
    Bp = _round_up(Bp, block_b)
    grid = (Bp // block_b,)

    x_flat = jnp.pad(input_seq.reshape(B, TD).astype(cdt),
                     ((0, Bp - B), (0, TDp - TD)))
    p_flat = jnp.pad(prototypes.reshape(P, TD).astype(cdt),
                     ((0, Pp - P), (0, TDp - TD)))
    m_pad = jnp.pad(mask.astype(jnp.float32), ((0, Bp - B), (0, Tp - T)))
    p2t = jnp.pad(jnp.sum(jnp.square(prototypes.astype(jnp.float32)), axis=-1),
                  ((0, Pp - P), (0, Tp - T)))                         # (Pp, Tp)

    kernel = functools.partial(_ncc_kernel, D=D, P_real=P)

    out_shapes = (
        jax.ShapeDtypeStruct((Bp, Pp), jnp.float32),       # distances (padded)
        jax.ShapeDtypeStruct((Bp, 1), jnp.int32),          # argmin indices
        jax.ShapeDtypeStruct((Bp, TDp), proto_dt),         # gathered protos, flat
    )
    in_specs = [
        pl.BlockSpec((block_b, TDp), lambda i: (i, 0)),    # x
        pl.BlockSpec((Pp, TDp), lambda i: (0, 0)),         # prototypes (resident)
        pl.BlockSpec((block_b, Tp), lambda i: (i, 0)),     # compact mask
        pl.BlockSpec((Pp, Tp), lambda i: (0, 0)),          # sum_d p^2 (resident)
    ]
    out_specs = (
        pl.BlockSpec((block_b, Pp), lambda i: (i, 0)),
        pl.BlockSpec((block_b, 1), lambda i: (i, 0)),
        pl.BlockSpec((block_b, TDp), lambda i: (i, 0)),
    )

    # ---- VMEM budget (double-buffered B blocks + resident prototype arrays) ----
    blk_bytes = (block_b * TDp * cdt.itemsize + block_b * Tp * 4
                 + block_b * Pp * 4 + block_b * 4
                 + block_b * TDp * proto_dt.itemsize)
    resident = Pp * TDp * cdt.itemsize + Pp * Tp * 4
    vmem_est = 2 * blk_bytes + 2 * resident + Tp * TDp * 4 + (2 << 20)
    vmem_limit = int(min(48 << 20, max(16 << 20, 4 * vmem_est)))     # v7x-safe cap

    flops = 2 * Bp * Pp * TDp * 2 + 2 * Bp * Pp * Tp + 2 * Bp * Tp * TDp + 4 * Bp * TDp
    bytes_accessed = (x_flat.size * cdt.itemsize + p_flat.size * cdt.itemsize
                      + m_pad.size * 4 + p2t.size * 4
                      + Bp * Pp * 4 + Bp * 4 + Bp * TDp * proto_dt.itemsize)

    dist_p, idx_p, out_p = pl.pallas_call(
        kernel,
        out_shape=out_shapes,
        grid=grid,
        in_specs=in_specs,
        out_specs=out_specs,
        compiler_params=pltpu.CompilerParams(
            dimension_semantics=("parallel",),
            vmem_limit_bytes=vmem_limit),
        cost_estimate=pl.CostEstimate(flops=int(flops), transcendentals=0,
                                      bytes_accessed=int(bytes_accessed)),
    )(x_flat, p_flat, m_pad, p2t)

    distances = dist_p[:B, :P]
    indices = idx_p[:B, 0]
    output_seq = out_p[:B, :TD].reshape(B, T, D).astype(proto_dt)
    return (output_seq, input_seq, distances, indices,
            label.reshape(B), mask.reshape(B, T))


def ncc_reference(input_seq, label, mask, prototypes):
    """Pure-JAX reference mirroring the PyTorch module."""
    B, T, D = input_seq.shape
    diff = input_seq[:, None] - prototypes[None]                     # (B, P, T, D)
    dist = jnp.sum(mask[:, None, :, None] * diff * diff, axis=(2, 3))
    idx = jnp.argmin(dist, axis=1)
    out = prototypes[idx]
    return out, input_seq, dist, idx, label.reshape(B), mask.reshape(B, T)


if __name__ == "__main__":
    # Small shapes consistent with the module: input_dim=4, num_steps=16,
    # num_prototypes=32, batch=2, num_classes=9.
    B, T, D, P = 2, 16, 4, 32

    key = jax.random.PRNGKey(0)
    k_x, k_p, k_m, k_l = jax.random.split(key, 4)

    input_seq = jax.random.normal(k_x, (B, T, D), dtype=jnp.float32)
    prototypes = jax.random.normal(k_p, (P, T, D), dtype=jnp.float32)   # randn init
    mask = (jax.random.uniform(k_m, (B, T)) > 0.3).astype(jnp.float32)
    label = jax.random.randint(k_l, (B,), 0, 9, dtype=jnp.int32)

    # ---- exact (f32) path ----
    outs = jax.block_until_ready(ncc_forward(input_seq, label, mask, prototypes))
    output_seq, in_seq, distances, indices, lbl, msk = outs

    r_out, _, r_dist, r_idx, _, _ = ncc_reference(input_seq, label, mask, prototypes)
    assert output_seq.shape == (B, T, D)
    assert distances.shape == (B, P)
    assert indices.shape == (B,)
    assert jnp.allclose(distances, r_dist, rtol=1e-4, atol=1e-3)
    assert jnp.array_equal(indices, r_idx.astype(indices.dtype))
    assert jnp.allclose(output_seq, r_out, rtol=1e-5, atol=1e-5)

    # ---- bf16 MXU-operand path (production config; f32 accumulation) ----
    outs16 = jax.block_until_ready(
        ncc_forward(input_seq, label, mask, prototypes, compute_dtype=jnp.bfloat16))
    o16, _, d16, i16, _, _ = outs16
    assert d16.shape == (B, P) and o16.shape == (B, T, D) and i16.shape == (B,)
    assert jnp.allclose(d16, r_dist, rtol=5e-2, atol=1.0)
    assert jnp.allclose(o16, prototypes[i16], rtol=2e-2, atol=5e-2)

    print("KERNEL_OK")
</pallas_src>

<mosaic_0001>
module attributes {stable_mosaic.version = 11 : i64} {
  func.func @_ncc_kernel(%arg0: i32, %arg1: memref<8x128xf32, #tpu.memory_space<vmem>>, %arg2: memref<128x128xf32, #tpu.memory_space<vmem>>, %arg3: memref<8x128xf32, #tpu.memory_space<vmem>>, %arg4: memref<128x128xf32, #tpu.memory_space<vmem>>, %arg5: memref<8x128xf32, #tpu.memory_space<vmem>>, %arg6: memref<8x1xi32, #tpu.memory_space<vmem>>, %arg7: memref<8x128xf32, #tpu.memory_space<vmem>>) attributes {dimension_semantics = [#tpu.dimension_semantics<parallel>], iteration_bounds = array<i64: 1>, scalar_prefetch = 0 : i64, scratch_operands = 0 : i64, tpu.core_type = #tpu.core_type<tc>, window_params = [{transform_indices = @transform_0, window_bounds = array<i64: 8, 128>}, {pipeline_mode = #tpu.pipeline_mode<synchronous>, transform_indices = @transform_1, window_bounds = array<i64: 128, 128>}, {transform_indices = @transform_2, window_bounds = array<i64: 8, 128>}, {pipeline_mode = #tpu.pipeline_mode<synchronous>, transform_indices = @transform_3, window_bounds = array<i64: 128, 128>}, {transform_indices = @transform_4, window_bounds = array<i64: 8, 128>}, {transform_indices = @transform_5, window_bounds = array<i64: 8, 1>}, {transform_indices = @transform_6, window_bounds = array<i64: 8, 128>}]} {
    %c0 = arith.constant 0 : index
    %c0_0 = arith.constant 0 : index
    %0 = vector.load %arg1[%c0, %c0_0] : memref<8x128xf32, #tpu.memory_space<vmem>>, vector<8x128xf32>
    %c0_1 = arith.constant 0 : index
    %c0_2 = arith.constant 0 : index
    %1 = vector.load %arg2[%c0_1, %c0_2] : memref<128x128xf32, #tpu.memory_space<vmem>>, vector<128x128xf32>
    %c0_3 = arith.constant 0 : index
    %c0_4 = arith.constant 0 : index
    %2 = vector.load %arg3[%c0_3, %c0_4] : memref<8x128xf32, #tpu.memory_space<vmem>>, vector<8x128xf32>
    %c0_5 = arith.constant 0 : index
    %c0_6 = arith.constant 0 : index
    %3 = vector.load %arg4[%c0_5, %c0_6] : memref<128x128xf32, #tpu.memory_space<vmem>>, vector<128x128xf32>
    %4 = tpu.iota {dimensions = array<i32: 0>} : vector<128x128xi32>
    %5 = tpu.iota {dimensions = array<i32: 1>} : vector<128x128xi32>
    %c4_i32 = arith.constant 4 : i32
    %6 = vector.broadcast %c4_i32 : i32 to vector<128x128xi32>
    %7 = arith.muli %4, %6 : vector<128x128xi32>
    %8 = arith.cmpi sge, %5, %7 : vector<128x128xi32>
    %c1_i32 = arith.constant 1 : i32
    %9 = vector.broadcast %c1_i32 : i32 to vector<128x128xi32>
    %10 = arith.addi %4, %9 : vector<128x128xi32>
    %c4_i32_7 = arith.constant 4 : i32
    %11 = vector.broadcast %c4_i32_7 : i32 to vector<128x128xi32>
    %12 = arith.muli %10, %11 : vector<128x128xi32>
    %13 = arith.cmpi slt, %5, %12 : vector<128x128xi32>
    %14 = arith.andi %8, %13 : vector<128x128xi1>
    %15 = arith.extui %14 : vector<128x128xi1> to vector<128x128xi32>
    %16 = arith.sitofp %15 : vector<128x128xi32> to vector<128x128xf32>
    %cst = arith.constant dense<0.000000e+00> : vector<8x128xf32>
    %17 = tpu.matmul %2, %16, %cst {dimension_numbers = #tpu.dot_dimension_numbers<[1], [0], [0], [1], [0, 0, 1, 1], [], []>} : vector<8x128xf32>, vector<128x128xf32>, vector<8x128xf32> -> vector<8x128xf32>
    %18 = arith.mulf %0, %17 : vector<8x128xf32>
    %19 = arith.mulf %18, %0 : vector<8x128xf32>
    %cst_8 = arith.constant dense<0.000000e+00> : vector<8xf32>
    %20 = vector.multi_reduction <add>, %19, %cst_8 [1] : vector<8x128xf32> to vector<8xf32>
    %21 = vector.shape_cast %20 : vector<8xf32> to vector<8x1xf32>
    %cst_9 = arith.constant dense<0.000000e+00> : vector<8x128xf32>
    %22 = tpu.matmul %2, %3, %cst_9 {dimension_numbers = #tpu.dot_dimension_numbers<[1], [1], [0], [0], [0, 0, 1, 0], [], []>} : vector<8x128xf32>, vector<128x128xf32>, vector<8x128xf32> -> vector<8x128xf32>
    %cst_10 = arith.constant dense<0.000000e+00> : vector<8x128xf32>
    %23 = tpu.matmul %18, %1, %cst_10 {dimension_numbers = #tpu.dot_dimension_numbers<[1], [1], [0], [0], [0, 0, 1, 0], [], []>} : vector<8x128xf32>, vector<128x128xf32>, vector<8x128xf32> -> vector<8x128xf32>
    %24 = vector.broadcast %21 : vector<8x1xf32> to vector<8x128xf32>
    %25 = arith.addf %24, %22 : vector<8x128xf32>
    %cst_11 = arith.constant 2.000000e+00 : f32
    %26 = vector.broadcast %cst_11 : f32 to vector<8x128xf32>
    %27 = arith.mulf %26, %23 : vector<8x128xf32>
    %28 = arith.subf %25, %27 : vector<8x128xf32>
    %cst_12 = arith.constant 0.000000e+00 : f32
    %29 = vector.broadcast %cst_12 : f32 to vector<8x128xf32>
    %30 = arith.maximumf %28, %29 : vector<8x128xf32>
    %c0_13 = arith.constant 0 : index
    %c0_14 = arith.constant 0 : index
    %31 = vector.load %arg5[%c0_13, %c0_14] : memref<8x128xf32, #tpu.memory_space<vmem>>, vector<8x128xf32>
    tpu.vector_store %arg5[%c0_13, %c0_14], %30 {strides = array<i32>} : memref<8x128xf32, #tpu.memory_space<vmem>>, vector<8x128xf32>,
    %32 = tpu.iota {dimensions = array<i32: 1>} : vector<8x128xi32>
    %c32_i32 = arith.constant 32 : i32
    %33 = vector.broadcast %c32_i32 : i32 to vector<8x128xi32>
    %34 = arith.cmpi slt, %32, %33 : vector<8x128xi32>
    %cst_15 = arith.constant 0x7F800000 : f32
    %35 = vector.broadcast %cst_15 : f32 to vector<8x128xf32>
    %36 = arith.select %34, %30, %35 : vector<8x128xi1>, vector<8x128xf32>
    %cst_16 = arith.constant dense<0x7F800000> : vector<8xf32>
    %37 = vector.multi_reduction <minimumf>, %36, %cst_16 [1] : vector<8x128xf32> to vector<8xf32>
    %38 = vector.shape_cast %37 : vector<8xf32> to vector<8x1xf32>
    %39 = vector.broadcast %38 : vector<8x1xf32> to vector<8x128xf32>
    %40 = arith.cmpf oeq, %36, %39 : vector<8x128xf32>
    %41 = arith.sitofp %32 : vector<8x128xi32> to vector<8x128xf32>
    %cst_17 = arith.constant 1.280000e+02 : f32
    %42 = vector.broadcast %cst_17 : f32 to vector<8x128xf32>
    %43 = arith.select %40, %41, %42 : vector<8x128xi1>, vector<8x128xf32>
    %cst_18 = arith.constant dense<0x7F800000> : vector<8xf32>
    %44 = vector.multi_reduction <minimumf>, %43, %cst_18 [1] : vector<8x128xf32> to vector<8xf32>
    %45 = vector.shape_cast %44 : vector<8xf32> to vector<8x1xf32>
    %cst_19 = arith.constant 3.100000e+01 : f32
    %46 = vector.broadcast %cst_19 : f32 to vector<8x1xf32>
    %47 = arith.minimumf %45, %46 : vector<8x1xf32>
    %48 = arith.fptosi %47 : vector<8x1xf32> to vector<8x1xi32>
    %c0_20 = arith.constant 0 : index
    %c0_21 = arith.constant 0 : index
    %49 = vector.load %arg6[%c0_20, %c0_21] : memref<8x1xi32, #tpu.memory_space<vmem>>, vector<8x1xi32>
    tpu.vector_store %arg6[%c0_20, %c0_21], %48 {strides = array<i32>} : memref<8x1xi32, #tpu.memory_space<vmem>>, vector<8x1xi32>,
    %50 = vector.broadcast %48 : vector<8x1xi32> to vector<8x128xi32>
    %51 = arith.cmpi eq, %32, %50 : vector<8x128xi32>
    %52 = arith.extui %51 : vector<8x128xi1> to vector<8x128xi32>
    %53 = arith.sitofp %52 : vector<8x128xi32> to vector<8x128xf32>
    %cst_22 = arith.constant dense<0.000000e+00> : vector<8x128xf32>
    %54 = tpu.matmul %53, %1, %cst_22 {dimension_numbers = #tpu.dot_dimension_numbers<[1], [0], [0], [1], [0, 0, 1, 1], [], []>} : vector<8x128xf32>, vector<128x128xf32>, vector<8x128xf32> -> vector<8x128xf32>
    %c0_23 = arith.constant 0 : index
    %c0_24 = arith.constant 0 : index
    %55 = vector.load %arg7[%c0_23, %c0_24] : memref<8x128xf32, #tpu.memory_space<vmem>>, vector<8x128xf32>
    tpu.vector_store %arg7[%c0_23, %c0_24], %54 {strides = array<i32>} : memref<8x128xf32, #tpu.memory_space<vmem>>, vector<8x128xf32>,
    return
  }
  func.func @transform_0(%arg0: i32) -> (i32, i32) {
    %c0_i32 = arith.constant 0 : i32
    %c0_i32_0 = arith.constant 0 : i32
    return %arg0, %c0_i32 : i32, i32
  }
  func.func @transform_1(%arg0: i32) -> (i32, i32) {
    %c0_i32 = arith.constant 0 : i32
    %c0_i32_0 = arith.constant 0 : i32
    %c0_i32_1 = arith.constant 0 : i32
    return %c0_i32, %c0_i32_0 : i32, i32
  }
  func.func @transform_2(%arg0: i32) -> (i32, i32) {
    %c0_i32 = arith.constant 0 : i32
    %c0_i32_0 = arith.constant 0 : i32
    return %arg0, %c0_i32 : i32, i32
  }
  func.func @transform_3(%arg0: i32) -> (i32, i32) {
    %c0_i32 = arith.constant 0 : i32
    %c0_i32_0 = arith.constant 0 : i32
    %c0_i32_1 = arith.constant 0 : i32
    return %c0_i32, %c0_i32_0 : i32, i32
  }
  func.func @transform_4(%arg0: i32) -> (i32, i32) {
    %c0_i32 = arith.constant 0 : i32
    %c0_i32_0 = arith.constant 0 : i32
    return %arg0, %c0_i32 : i32, i32
  }
  func.func @transform_5(%arg0: i32) -> (i32, i32) {
    %c0_i32 = arith.constant 0 : i32
    %c0_i32_0 = arith.constant 0 : i32
    return %arg0, %c0_i32 : i32, i32
  }
  func.func @transform_6(%arg0: i32) -> (i32, i32) {
    %c0_i32 = arith.constant 0 : i32
    %c0_i32_0 = arith.constant 0 : i32
    return %arg0, %c0_i32 : i32, i32
  }
}

</mosaic_0001>

<llo_original>
// kernel: tpu_custom_call.1
$region0: #{tpu_custom_call.1}
  #allocation0 [shape = 'u32[]', space=smem, size = 0x4, offset = 0x4, fixed_abs, tag = 'smem constant byte address 0x4 - core index']
  #allocation1 [shape = 'u32[72,128]{1,0:T(1,128)}', space=vmem, size = 0x9000, scoped, tag = 'internal scratch']
  %s0 = inlined_call_operand.hbm [shape: f32[8,128], index: 0, kind: input, shape index: {}]
  %s1 = inlined_call_operand.hbm [shape: f32[128,128], index: 1, kind: input, shape index: {}]
  %s2 = inlined_call_operand.hbm [shape: f32[8,128], index: 2, kind: input, shape index: {}]
  %s3 = inlined_call_operand.hbm [shape: f32[128,128], index: 3, kind: input, shape index: {}]
  %s4 = inlined_call_operand.hbm [shape: f32[8,128], index: 4, kind: output, shape index: {0}]
  %s5 = inlined_call_operand.vmem [shape: s32[8,1], index: 5, kind: output, shape index: {1}]
  %s6 = inlined_call_operand.hbm [shape: f32[8,128], index: 6, kind: output, shape index: {2}]
  %7 = xla_tuple %s4, %s5, %s6
  %s8 = sld [smem:[#allocation0]]
  $region58: #{tpu_custom_call.1} parent=0
    _
  %s10 = ssub.s32 1, %s8
  %s11 = scalar_select 0, %s10, %s8
  $region1: #{tpu_custom_call.1} parent=0
    #allocation2 [shape = 'u8[4096]{0}', space=vmem, size = 0x1000, scoped, tag = 'input window, operand 0, single buffered']
    #allocation3 [shape = 's32[1]{0}', space=sflag, size = 0x4, scoped, tag = 'scoped memory for tpu_custom_call.1']
    #allocation4 [shape = 's32[1]{0}', space=sflag, size = 0x4, scoped, tag = 'scoped memory for tpu_custom_call.1']
    #allocation5 [shape = 'u8[65536]{0}', space=vmem, size = 0x10000, scoped, tag = 'input window, operand 1, single buffered']
    #allocation6 [shape = 's32[1]{0}', space=sflag, size = 0x4, scoped, tag = 'scoped memory for tpu_custom_call.1']
    #allocation7 [shape = 'u8[4096]{0}', space=vmem, size = 0x1000, scoped, tag = 'input window, operand 2, single buffered']
    #allocation8 [shape = 'u8[65536]{0}', space=vmem, size = 0x10000, scoped, tag = 'input window, operand 3, single buffered']
    #allocation9 [shape = 's32[1]{0}', space=sflag, size = 0x4, scoped, tag = 'scoped memory for tpu_custom_call.1']
    #allocation10 [shape = 'u8[4096]{0}', space=vmem, size = 0x1000, scoped, tag = 'output window, operand 0, single buffered']
    #allocation11 [shape = 'u8[4096]{0}', space=vmem, size = 0x1000, scoped, tag = 'output window, operand 2, single buffered']
    #allocation12 [shape = 's32[1]{0}', space=sflag, size = 0x4, scoped, tag = 'scoped memory for tpu_custom_call.1']
    %12 = vsyncpa [#allocation3], 0
    %13 = vsyncpa [#allocation6], 0
    %14 = vsyncpa [#allocation9], 0
    %15 = vsyncpa [#allocation4], 0
    %16 = vsyncpa [#allocation12], 0
    // Predicated region
    $region2: #{tpu_custom_call.1} parent=1 // pred_check
      _
    $region3: #{tpu_custom_call.1} parent=1 // pred_check_branch
      %18 = sbr.rel (0) target = $region5
    $region4: #{tpu_custom_call.1} parent=1 // pred_region
      %20 = vsyncadd [#allocation3], 0
      %s22 = sshll.u32 %s0, 4
      %s23 = int_to_ptr.hbm [resolvable:$true] %s22
      %s24 = sshll.u32 [#allocation2], 4
      %s25 = int_to_ptr.vmem [resolvable:$true] %s24
      %27 = dma.hbm_to_vmem [thread:$0]  %s23, 128, %s25, [#allocation3]
    $region5: #{tpu_custom_call.1} parent=1 // pred_fallthru
      _
    // Predicated region
    $region6: #{tpu_custom_call.1} parent=1 // pred_check
      _
    $region7: #{tpu_custom_call.1} parent=1 // pred_check_branch
      %29 = sbr.rel (0) target = $region9
    $region8: #{tpu_custom_call.1} parent=1 // pred_region
      %31 = vsyncadd [#allocation6], 0
      %s32 = sshll.u32 %s1, 4
      %s33 = int_to_ptr.hbm [resolvable:$true] %s32
      %s34 = sshll.u32 [#allocation5], 4
      %s35 = int_to_ptr.vmem [resolvable:$true] %s34
      %40 = dma.hbm_to_vmem [thread:$0]  %s33, 2048, %s35, [#allocation6], 128, 128, 8
    $region9: #{tpu_custom_call.1} parent=1 // pred_fallthru
      _
    // Predicated region
    $region10: #{tpu_custom_call.1} parent=1 // pred_check
      _
    $region11: #{tpu_custom_call.1} parent=1 // pred_check_branch
      %42 = sbr.rel (0) target = $region13
    $region12: #{tpu_custom_call.1} parent=1 // pred_region
      %44 = vsyncadd [#allocation6], 0
      %s46 = sshll.u32 %s2, 4
      %s47 = int_to_ptr.hbm [resolvable:$true] %s46
      %s48 = sshll.u32 [#allocation7], 4
      %s49 = int_to_ptr.vmem [resolvable:$true] %s48
      %51 = dma.hbm_to_vmem [thread:$0]  %s47, 128, %s49, [#allocation6]
    $region13: #{tpu_custom_call.1} parent=1 // pred_fallthru
      _
    // Predicated region
    $region14: #{tpu_custom_call.1} parent=1 // pred_check
      _
    $region15: #{tpu_custom_call.1} parent=1 // pred_check_branch
      %53 = sbr.rel (0) target = $region17
    $region16: #{tpu_custom_call.1} parent=1 // pred_region
      %55 = vsyncadd [#allocation9], 0
      %s56 = sshll.u32 %s3, 4
      %s57 = int_to_ptr.hbm [resolvable:$true] %s56
      %s58 = sshll.u32 [#allocation8], 4
      %s59 = int_to_ptr.vmem [resolvable:$true] %s58
      %64 = dma.hbm_to_vmem [thread:$0]  %s57, 2048, %s59, [#allocation9], 128, 128, 8
    $region17: #{tpu_custom_call.1} parent=1 // pred_fallthru
      _
    // Predicated region
    $region18: #{tpu_custom_call.1} parent=1 // pred_check
      _
    $region19: #{tpu_custom_call.1} parent=1 // pred_check_branch
      %66 = sbr.rel (0) target = $region21
    $region20: #{tpu_custom_call.1} parent=1 // pred_region
      %68 = dma.done [#allocation3], 128
    $region21: #{tpu_custom_call.1} parent=1 // pred_fallthru
      _
    // Predicated region
    $region22: #{tpu_custom_call.1} parent=1 // pred_check
      _
    $region23: #{tpu_custom_call.1} parent=1 // pred_check_branch
      %70 = sbr.rel (0) target = $region25
    $region24: #{tpu_custom_call.1} parent=1 // pred_region
      %72 = dma.done [#allocation6], 2048
    $region25: #{tpu_custom_call.1} parent=1 // pred_fallthru
      _
    // Predicated region
    $region26: #{tpu_custom_call.1} parent=1 // pred_check
      _
    $region27: #{tpu_custom_call.1} parent=1 // pred_check_branch
      %74 = sbr.rel (0) target = $region29
    $region28: #{tpu_custom_call.1} parent=1 // pred_region
      %76 = dma.done [#allocation6], 128
    $region29: #{tpu_custom_call.1} parent=1 // pred_fallthru
      _
    // Predicated region
    $region30: #{tpu_custom_call.1} parent=1 // pred_check
      _
    $region31: #{tpu_custom_call.1} parent=1 // pred_check_branch
      %78 = sbr.rel (0) target = $region33
    $region32: #{tpu_custom_call.1} parent=1 // pred_region
      %80 = dma.done [#allocation9], 2048
    $region33: #{tpu_custom_call.1} parent=1 // pred_fallthru
      _
    %v81 = vld [vmem:[#allocation2] sm:$0xff]
    %v82 = vld [vmem:[#allocation5] sm:$0xff]
    %v83 = vld [vmem:[#allocation5 + $0x8] sm:$0xff]
    %v84 = vld [vmem:[#allocation5 + $0x10] sm:$0xff]
    %v85 = vld [vmem:[#allocation5 + $0x18] sm:$0xff]
    %v86 = vld [vmem:[#allocation5 + $0x20] sm:$0xff]
    %v87 = vld [vmem:[#allocation5 + $0x28] sm:$0xff]
    %v88 = vld [vmem:[#allocation5 + $0x30] sm:$0xff]
    %v89 = vld [vmem:[#allocation5 + $0x38] sm:$0xff]
    %v90 = vld [vmem:[#allocation5 + $0x40] sm:$0xff]
    %v91 = vld [vmem:[#allocation5 + $0x48] sm:$0xff]
    %v92 = vld [vmem:[#allocation5 + $0x50] sm:$0xff]
    %v93 = vld [vmem:[#allocation5 + $0x58] sm:$0xff]
    %v94 = vld [vmem:[#allocation5 + $0x60] sm:$0xff]
    %v95 = vld [vmem:[#allocation5 + $0x68] sm:$0xff]
    %v96 = vld [vmem:[#allocation5 + $0x70] sm:$0xff]
    %v97 = vld [vmem:[#allocation5 + $0x78] sm:$0xff]
    %v98 = vld [vmem:[#allocation7] sm:$0xff]
    %v99 = vld [vmem:[#allocation8] sm:$0xff]
    %v100 = vld [vmem:[#allocation8 + $0x8] sm:$0xff]
    %v101 = vld [vmem:[#allocation8 + $0x10] sm:$0xff]
    %v102 = vld [vmem:[#allocation8 + $0x18] sm:$0xff]
    %v103 = vld [vmem:[#allocation8 + $0x20] sm:$0xff]
    %v104 = vld [vmem:[#allocation8 + $0x28] sm:$0xff]
    %v105 = vld [vmem:[#allocation8 + $0x30] sm:$0xff]
    %v106 = vld [vmem:[#allocation8 + $0x38] sm:$0xff]
    %v107 = vld [vmem:[#allocation8 + $0x40] sm:$0xff]
    %v108 = vld [vmem:[#allocation8 + $0x48] sm:$0xff]
    %v109 = vld [vmem:[#allocation8 + $0x50] sm:$0xff]
    %v110 = vld [vmem:[#allocation8 + $0x58] sm:$0xff]
    %v111 = vld [vmem:[#allocation8 + $0x60] sm:$0xff]
    %v112 = vld [vmem:[#allocation8 + $0x68] sm:$0xff]
    %v113 = vld [vmem:[#allocation8 + $0x70] sm:$0xff]
    %v114 = vld [vmem:[#allocation8 + $0x78] sm:$0xff]
    %v115 = vlaneseq
    %v116 = vshrl.u32 %v115, 7
    %v117 = vadd.s32 %v116, 8
    %v118 = vadd.s32 %v116, 16
    %v119 = vadd.s32 %v116, 24
    %v120 = vadd.s32 %v116, 32
    %v121 = vadd.s32 %v116, 40
    %v122 = vadd.s32 %v116, 48
    %v123 = vadd.s32 %v116, 56
    %v124 = vadd.s32 %v116, 64
    %v125 = vadd.s32 %v116, 72
    %v126 = vadd.s32 %v116, 80
    %v127 = vadd.s32 %v116, 88
    %v128 = vadd.s32 %v116, 96
    %v129 = vadd.s32 %v116, 104
    %v130 = vadd.s32 %v116, 112
    %v131 = vadd.s32 %v116, 120
    %v132 = vlaneseq
    %v133 = vand.u32 %v132, 127
    %v134 = vmul.u32 %v116, 4
    %v135 = vmul.u32 %v117, 4
    %v136 = vmul.u32 %v118, 4
    %v137 = vmul.u32 %v119, 4
    %v138 = vmul.u32 %v120, 4
    %v139 = vmul.u32 %v121, 4
    %v140 = vmul.u32 %v122, 4
    %v141 = vmul.u32 %v123, 4
    %v142 = vmul.u32 %v124, 4
    %v143 = vmul.u32 %v125, 4
    %v144 = vmul.u32 %v126, 4
    %v145 = vmul.u32 %v127, 4
    %v146 = vmul.u32 %v128, 4
    %v147 = vmul.u32 %v129, 4
    %v148 = vmul.u32 %v130, 4
    %v149 = vmul.u32 %v131, 4
    %vm150 = vcmp.ge.s32.totalorder %v133, %v134
    %vm151 = vcmp.ge.s32.totalorder %v133, %v135
    %vm152 = vcmp.ge.s32.totalorder %v133, %v136
    %vm153 = vcmp.ge.s32.totalorder %v133, %v137
    %vm154 = vcmp.ge.s32.totalorder %v133, %v138
    %vm155 = vcmp.ge.s32.totalorder %v133, %v139
    %vm156 = vcmp.ge.s32.totalorder %v133, %v140
    %vm157 = vcmp.ge.s32.totalorder %v133, %v141
    %vm158 = vcmp.ge.s32.totalorder %v133, %v142
    %vm159 = vcmp.ge.s32.totalorder %v133, %v143
    %vm160 = vcmp.ge.s32.totalorder %v133, %v144
    %vm161 = vcmp.ge.s32.totalorder %v133, %v145
    %vm162 = vcmp.ge.s32.totalorder %v133, %v146
    %vm163 = vcmp.ge.s32.totalorder %v133, %v147
    %vm164 = vcmp.ge.s32.totalorder %v133, %v148
    %vm165 = vcmp.ge.s32.totalorder %v133, %v149
    %v166 = vadd.s32 %v116, 1
    %v167 = vadd.s32 %v117, 1
    %v168 = vadd.s32 %v118, 1
    %v169 = vadd.s32 %v119, 1
    %v170 = vadd.s32 %v120, 1
    %v171 = vadd.s32 %v121, 1
    %v172 = vadd.s32 %v122, 1
    %v173 = vadd.s32 %v123, 1
    %v174 = vadd.s32 %v124, 1
    %v175 = vadd.s32 %v125, 1
    %v176 = vadd.s32 %v126, 1
    %v177 = vadd.s32 %v127, 1
    %v178 = vadd.s32 %v128, 1
    %v179 = vadd.s32 %v129, 1
    %v180 = vadd.s32 %v130, 1
    %v181 = vadd.s32 %v131, 1
    %v182 = vmul.u32 %v166, 4
    %v183 = vmul.u32 %v167, 4
    %v184 = vmul.u32 %v168, 4
    %v185 = vmul.u32 %v169, 4
    %v186 = vmul.u32 %v170, 4
    %v187 = vmul.u32 %v171, 4
    %v188 = vmul.u32 %v172, 4
    %v189 = vmul.u32 %v173, 4
    %v190 = vmul.u32 %v174, 4
    %v191 = vmul.u32 %v175, 4
    %v192 = vmul.u32 %v176, 4
    %v193 = vmul.u32 %v177, 4
    %v194 = vmul.u32 %v178, 4
    %v195 = vmul.u32 %v179, 4
    %v196 = vmul.u32 %v180, 4
    %v197 = vmul.u32 %v181, 4
    %vm198 = vcmp.lt.s32.totalorder %v133, %v182
    %vm199 = vcmp.lt.s32.totalorder %v133, %v183
    %vm200 = vcmp.lt.s32.totalorder %v133, %v184
    %vm201 = vcmp.lt.s32.totalorder %v133, %v185
    %vm202 = vcmp.lt.s32.totalorder %v133, %v186
    %vm203 = vcmp.lt.s32.totalorder %v133, %v187
    %vm204 = vcmp.lt.s32.totalorder %v133, %v188
    %vm205 = vcmp.lt.s32.totalorder %v133, %v189
    %vm206 = vcmp.lt.s32.totalorder %v133, %v190
    %vm207 = vcmp.lt.s32.totalorder %v133, %v191
    %vm208 = vcmp.lt.s32.totalorder %v133, %v192
    %vm209 = vcmp.lt.s32.totalorder %v133, %v193
    %vm210 = vcmp.lt.s32.totalorder %v133, %v194
    %vm211 = vcmp.lt.s32.totalorder %v133, %v195
    %vm212 = vcmp.lt.s32.totalorder %v133, %v196
    %vm213 = vcmp.lt.s32.totalorder %v133, %v197
    %vm214 = vmand %vm150, %vm198
    %vm215 = vmand %vm151, %vm199
    %vm216 = vmand %vm152, %vm200
    %vm217 = vmand %vm153, %vm201
    %vm218 = vmand %vm154, %vm202
    %vm219 = vmand %vm155, %vm203
    %vm220 = vmand %vm156, %vm204
    %vm221 = vmand %vm157, %vm205
    %vm222 = vmand %vm158, %vm206
    %vm223 = vmand %vm159, %vm207
    %vm224 = vmand %vm160, %vm208
    %vm225 = vmand %vm161, %vm209
    %vm226 = vmand %vm162, %vm210
    %vm227 = vmand %vm163, %vm211
    %vm228 = vmand %vm164, %vm212
    %vm229 = vmand %vm165, %vm213
    %v230 = vsel %vm214, 1, 0
    %v231 = vsel %vm215, 1, 0
    %v232 = vsel %vm216, 1, 0
    %v233 = vsel %vm217, 1, 0
    %v234 = vsel %vm218, 1, 0
    %v235 = vsel %vm219, 1, 0
    %v236 = vsel %vm220, 1, 0
    %v237 = vsel %vm221, 1, 0
    %v238 = vsel %vm222, 1, 0
    %v239 = vsel %vm223, 1, 0
    %v240 = vsel %vm224, 1, 0
    %v241 = vsel %vm225, 1, 0
    %v242 = vsel %vm226, 1, 0
    %v243 = vsel %vm227, 1, 0
    %v244 = vsel %vm228, 1, 0
    %v245 = vsel %vm229, 1, 0
    %v246 = vcvt.s32.f32 %v230
    %v247 = vcvt.s32.f32 %v231
    %v248 = vcvt.s32.f32 %v232
    %v249 = vcvt.s32.f32 %v233
    %v250 = vcvt.s32.f32 %v234
    %v251 = vcvt.s32.f32 %v235
    %v252 = vcvt.s32.f32 %v236
    %v253 = vcvt.s32.f32 %v237
    %v254 = vcvt.s32.f32 %v238
    %v255 = vcvt.s32.f32 %v239
    %v256 = vcvt.s32.f32 %v240
    %v257 = vcvt.s32.f32 %v241
    %v258 = vcvt.s32.f32 %v242
    %v259 = vcvt.s32.f32 %v243
    %v260 = vcvt.s32.f32 %v244
    %v261 = vcvt.s32.f32 %v245
    %262 = vmatpush.msra.mxu0 %v261
    %263 = vmatpush.msra.mxu0 %v260
    %264 = vmatpush.msra.mxu0 %v259
    %265 = vmatpush.msra.mxu0 %v258
    %266 = vmatpush.msra.mxu0 %v257
    %267 = vmatpush.msra.mxu0 %v256
    %268 = vmatpush.msra.mxu0 %v255
    %269 = vmatpush.msra.mxu0 %v254
    %270 = vmatpush.msra.mxu0 %v253
    %271 = vmatpush.msra.mxu0 %v252
    %272 = vmatpush.msra.mxu0 %v251
    %273 = vmatpush.msra.mxu0 %v250
    %274 = vmatpush.msra.mxu0 %v249
    %275 = vmatpush.msra.mxu0 %v248
    %276 = vmatpush.msra.mxu0 %v247
    %277 = vmatpush.msra.mxu0 %v246
    %278 = vmatmul.f32.gmra.mxu0 %v98
    %v279 = vpop.f32.mrf.mxu0
    %v280 = vadd.f32 0.0, %v279
    %281 = vdwg.mxu0
    %v282 = vmul.f32 %v81, %v280
    %v283 = vmul.f32 %v282, %v81
    %284 = vadd.xlane.f32.xlu0 %v283
    %v285 = vpop.xlane.xlu0 %284
    %286 = vmatpush.xpose.msra.mxu0 %v114
    %287 = vmatpush.xpose.msra.mxu0 %v113
    %288 = vmatpush.xpose.msra.mxu0 %v112
    %289 = vmatpush.xpose.msra.mxu0 %v111
    %290 = vmatpush.xpose.msra.mxu0 %v110
    %291 = vmatpush.xpose.msra.mxu0 %v109
    %292 = vmatpush.xpose.msra.mxu0 %v108
    %293 = vmatpush.xpose.msra.mxu0 %v107
    %294 = vmatpush.xpose.msra.mxu0 %v106
    %295 = vmatpush.xpose.msra.mxu0 %v105
    %296 = vmatpush.xpose.msra.mxu0 %v104
    %297 = vmatpush.xpose.msra.mxu0 %v103
    %298 = vmatpush.xpose.msra.mxu0 %v102
    %299 = vmatpush.xpose.msra.mxu0 %v101
    %300 = vmatpush.xpose.msra.mxu0 %v100
    %301 = vmatpush.xpose.msra.mxu0 %v99
    %302 = vmatmul.f32.gmra.mxu0 %v98
    %v303 = vpop.f32.mrf.mxu0
    %v304 = vadd.f32 0.0, %v303
    %305 = vdwg.mxu0
    %306 = vmatpush.xpose.msra.mxu0 %v97
    %307 = vmatpush.xpose.msra.mxu0 %v96
    %308 = vmatpush.xpose.msra.mxu0 %v95
    %309 = vmatpush.xpose.msra.mxu0 %v94
    %310 = vmatpush.xpose.msra.mxu0 %v93
    %311 = vmatpush.xpose.msra.mxu0 %v92
    %312 = vmatpush.xpose.msra.mxu0 %v91
    %313 = vmatpush.xpose.msra.mxu0 %v90
    %314 = vmatpush.xpose.msra.mxu0 %v89
    %315 = vmatpush.xpose.msra.mxu0 %v88
    %316 = vmatpush.xpose.msra.mxu0 %v87
    %317 = vmatpush.xpose.msra.mxu0 %v86
    %318 = vmatpush.xpose.msra.mxu0 %v85
    %319 = vmatpush.xpose.msra.mxu0 %v84
    %320 = vmatpush.xpose.msra.mxu0 %v83
    %321 = vmatpush.xpose.msra.mxu0 %v82
    %322 = vmatmul.f32.gmra.mxu0 %v282
    %v323 = vpop.f32.mrf.mxu0
    %v324 = vadd.f32 0.0, %v323
    %325 = vdwg.mxu0
    %v326 = vadd.f32 %v285, %v304
    %v327 = vmul.f32 %v324, 2.0
    %v328 = vsub.f32 %v326, %v327
    %v329 = vmax.f32 %v328, 0.0
    %330 = vst [vmem:[#allocation10] sm:$0xff] %v329
    %vm331 = vcmp.lt.s32.totalorder %v133, 32
    %v332 = vsel %vm331, %v329, inf
    %333 = vmin.xlane.f32.xlu0 %v332
    %v334 = vpop.xlane.xlu0 %333
    %vm335 = vcmp.eq.f32.partialorder %v332, %v334
    %v336 = vcvt.s32.f32 %v133
    %v337 = vsel %vm335, %v336, 128.0
    %338 = vmin.xlane.f32.xlu0 %v337
    %v339 = vpop.xlane.xlu0 %338
    %v340 = vmin.f32 %v339, 31.0
    %v341 = vcvt.f32.s32.to.zero.pseudo %v340
    %vm342 = vcmask 7168
    %343 = vst.msk [vmem:[%s5] sm:$0xff] %vm342, %v341
    %vm344 = vcmp.eq.s32.totalorder %v133, %v341
    %v345 = vsel %vm344, 1, 0
    %v346 = vcvt.s32.f32 %v345
    %347 = vmatpush.msra.mxu0 %v97
    %348 = vmatpush.msra.mxu0 %v96
    %349 = vmatpush.msra.mxu0 %v95
    %350 = vmatpush.msra.mxu0 %v94
    %351 = vmatpush.msra.mxu0 %v93
    %352 = vmatpush.msra.mxu0 %v92
    %353 = vmatpush.msra.mxu0 %v91
    %354 = vmatpush.msra.mxu0 %v90
    %355 = vmatpush.msra.mxu0 %v89
    %356 = vmatpush.msra.mxu0 %v88
    %357 = vmatpush.msra.mxu0 %v87
    %358 = vmatpush.msra.mxu0 %v86
    %359 = vmatpush.msra.mxu0 %v85
    %360 = vmatpush.msra.mxu0 %v84
    %361 = vmatpush.msra.mxu0 %v83
    %362 = vmatpush.msra.mxu0 %v82
    %363 = vmatmul.f32.gmra.mxu0 %v346
    %v364 = vpop.f32.mrf.mxu0
    %v365 = vadd.f32 0.0, %v364
    %366 = vdwg.mxu0
    %367 = vst [vmem:[#allocation11] sm:$0xff] %v365
    // Predicated region
    $region34: #{tpu_custom_call.1} parent=1 // pred_check
      _
    $region35: #{tpu_custom_call.1} parent=1 // pred_check_branch
      %369 = sbr.rel (0) target = $region37
    $region36: #{tpu_custom_call.1} parent=1 // pred_region
      %371 = vsyncadd [#allocation4], 0
      %s373 = sshll.u32 [#allocation10], 4
      %s374 = int_to_ptr.vmem [resolvable:$true] %s373
      %s375 = sshll.u32 %s4, 4
      %s376 = int_to_ptr.hbm [resolvable:$true] %s375
      %378 = dma.vmem_to_hbm [thread:$0]  %s374, 128, %s376, [#allocation4]
    $region37: #{tpu_custom_call.1} parent=1 // pred_fallthru
      _
    // Predicated region
    $region38: #{tpu_custom_call.1} parent=1 // pred_check
      _
    $region39: #{tpu_custom_call.1} parent=1 // pred_check_branch
      %380 = sbr.rel (0) target = $region41
    $region40: #{tpu_custom_call.1} parent=1 // pred_region
      _
    $region41: #{tpu_custom_call.1} parent=1 // pred_fallthru
      _
    // Predicated region
    $region42: #{tpu_custom_call.1} parent=1 // pred_check
      _
    $region43: #{tpu_custom_call.1} parent=1 // pred_check_branch
      %382 = sbr.rel (0) target = $region45
    $region44: #{tpu_custom_call.1} parent=1 // pred_region
      %384 = vsyncadd [#allocation12], 0
      %s386 = sshll.u32 [#allocation11], 4
      %s387 = int_to_ptr.vmem [resolvable:$true] %s386
      %s388 = sshll.u32 %s6, 4
      %s389 = int_to_ptr.hbm [resolvable:$true] %s388
      %391 = dma.vmem_to_hbm [thread:$0]  %s387, 128, %s389, [#allocation12]
    $region45: #{tpu_custom_call.1} parent=1 // pred_fallthru
      _
    // Predicated region
    $region46: #{tpu_custom_call.1} parent=1 // pred_check
      _
    $region47: #{tpu_custom_call.1} parent=1 // pred_check_branch
      %393 = sbr.rel (0) target = $region49
    $region48: #{tpu_custom_call.1} parent=1 // pred_region
      %395 = dma.done [#allocation4], 128
    $region49: #{tpu_custom_call.1} parent=1 // pred_fallthru
      _
    // Predicated region
    $region50: #{tpu_custom_call.1} parent=1 // pred_check
      _
    $region51: #{tpu_custom_call.1} parent=1 // pred_check_branch
      %397 = sbr.rel (0) target = $region53
    $region52: #{tpu_custom_call.1} parent=1 // pred_region
      _
    $region53: #{tpu_custom_call.1} parent=1 // pred_fallthru
      _
    // Predicated region
    $region54: #{tpu_custom_call.1} parent=1 // pred_check
      _
    $region55: #{tpu_custom_call.1} parent=1 // pred_check_branch
      %399 = sbr.rel (0) target = $region57
    $region56: #{tpu_custom_call.1} parent=1 // pred_region
      %401 = dma.done [#allocation12], 128
    $region57: #{tpu_custom_call.1} parent=1 // pred_fallthru
      _
    %402 = vsyncpa [#allocation3], 1
    %403 = vsyncpa [#allocation6], 1
    %404 = vsyncpa [#allocation9], 1
    %405 = vsyncpa [#allocation4], 1
    %406 = vsyncpa [#allocation12], 1

</llo_original>
